<compile_context>
chip_gen: v7x
topology: tpu7x:2x2x1
jax: 0.10.0
libtpu: 0.0.40
codegen_flags: <defaults>
</compile_context>

<pallas_src>
import functools

import jax
import jax.numpy as jnp
import numpy as np
from jax.experimental import pallas as pl
from jax.experimental.pallas import tpu as pltpu


def _round_up(v, m):
    return (v + m - 1) // m * m


def _next_pow2(v):
    v = int(v)
    return 1 if v <= 1 else 1 << (v - 1).bit_length()


def _pick_tm(n, block_rows):
    """Row tile = 8 * 2^k, capped at block_rows (itself rounded to 8 * 2^k)."""
    cap = 8 * _next_pow2(max(1, block_rows // 8))
    need = 8 * _next_pow2(max(1, -(-n // 8)))
    return min(cap, need)


# ---------------------------------------------------------------------------
# Pallas kernel: perturb + denoiser MLP + (8, C) partial squared-error sums
# ---------------------------------------------------------------------------
def _fold_rows(sq):
    """Fold (TM, C) -> (8, C) with tile-aligned VALU adds (tree when possible)."""
    while sq.shape[0] > 8:
        half = sq.shape[0] // 2
        if half % 8 == 0:
            sq = sq[:half, :] + sq[half:, :]
        else:  # fallback: linear fold of 8-row chunks (TM always a multiple of 8)
            out = sq[0:8, :]
            for i in range(1, sq.shape[0] // 8):
                out = out + sq[8 * i:8 * (i + 1), :]
            return out
    return sq


def _diffusion_loss_kernel(n_valid, needs_mask,
                           coef_ref,                       # (2, B) f32, SMEM (prefetch)
                           x_ref, noise_ref, bias_ref,     # per-batch / per-tile inputs
                           w1_ref, w2_ref, b2_ref,         # resident weights
                           psum_ref):                      # (1, 1, 8, C) output
    b = pl.program_id(0)
    m = pl.program_id(1)

    x = x_ref[0]            # (TM, C) f32
    noise = noise_ref[0]    # (TM, C) f32
    a = coef_ref[0, b]      # scalar f32: sqrt_alphas_cumprod[t[b]]
    s = coef_ref[1, b]      # scalar f32: sqrt_one_minus_alphas_cumprod[t[b]]

    # perturb_x: q(x_t | x_0)  (f32 elementwise on the VPU)
    perturbed = a * x + s * noise

    # denoiser model: time-conditioned 2-layer MLP, bf16 MXU operands, f32 accum.
    h = jnp.dot(perturbed.astype(jnp.bfloat16), w1_ref[...],
                preferred_element_type=jnp.float32)           # (TM, H)
    h = h + bias_ref[0]                                       # b1 + temb[t[b]]
    h = h * pl.reciprocal(1.0 + jnp.exp(-h), approx=True)     # SiLU (EUP exp + rcp)
    est = jnp.dot(h.astype(jnp.bfloat16), w2_ref[...],
                  preferred_element_type=jnp.float32)         # (TM, C)
    est = est + b2_ref[...]

    diff = est - noise
    if needs_mask:  # zero rows past N (row padding of the last tile within a batch)
        tm, c = diff.shape
        row_ids = m * tm + jax.lax.broadcasted_iota(jnp.int32, (tm, c), 0)
        diff = jnp.where(row_ids < n_valid, diff, 0.0)

    psum_ref[0, 0] = _fold_rows(diff * diff)                  # (8, C) partial sum


# ---------------------------------------------------------------------------
# Wrapper: per-batch grid, tiny SMEM scalars, final scalar reduce in JAX
# ---------------------------------------------------------------------------
def diffusion_loss_pallas(x, noise, t, buffers, params, block_rows=512):
    """GaussianDiffusion.forward's MSE loss via a Pallas TPU kernel."""
    B, N, C = x.shape
    H = params["w1"].shape[1]
    f32 = jnp.float32

    TM = _pick_tm(N, block_rows)
    N_pad = _round_up(N, TM)
    grid_m = N_pad // TM
    needs_mask = N_pad > N

    x3 = x.astype(f32)
    n3 = noise.astype(f32)
    if needs_mask:  # cheap row padding only; channels stay at C (no lane padding)
        x3 = jnp.pad(x3, ((0, 0), (0, N_pad - N), (0, 0)))
        n3 = jnp.pad(n3, ((0, 0), (0, N_pad - N), (0, 0)))

    # extract(a, t, x.shape) -> per-batch scalars, packed into one SMEM array.
    coef = jnp.stack([buffers["sqrt_alphas_cumprod"][t],
                      buffers["sqrt_one_minus_alphas_cumprod"][t]]).astype(f32)   # (2, B)

    # Fuse b1 + time embedding into one per-BATCH bias block (no per-row repeat).
    bias = (params["temb"][t] + params["b1"]).astype(f32)[:, None, :]              # (B, 1, H)

    # Weights: bf16 for the MXU, resident across the whole grid.
    w1 = params["w1"].astype(jnp.bfloat16)      # (C, H)
    w2 = params["w2"].astype(jnp.bfloat16)      # (H, C)
    b2 = params["b2"].astype(f32)               # (1, C)

    kernel = functools.partial(_diffusion_loss_kernel, N, needs_mask)

    partials = pl.pallas_call(
        kernel,
        out_shape=jax.ShapeDtypeStruct((B, grid_m, 8, C), f32),
        grid_spec=pltpu.PrefetchScalarGridSpec(
            num_scalar_prefetch=1,
            grid=(B, grid_m),
            in_specs=[
                pl.BlockSpec((1, TM, C), lambda b, m, c: (b, m, 0)),   # x rows
                pl.BlockSpec((1, TM, C), lambda b, m, c: (b, m, 0)),   # noise rows
                pl.BlockSpec((1, 1, H), lambda b, m, c: (b, 0, 0)),    # b1 + temb[t[b]]
                pl.BlockSpec((C, H), lambda b, m, c: (0, 0)),          # W1 (resident)
                pl.BlockSpec((H, C), lambda b, m, c: (0, 0)),          # W2 (resident)
                pl.BlockSpec((1, C), lambda b, m, c: (0, 0)),          # b2 (resident)
            ],
            out_specs=pl.BlockSpec((1, 1, 8, C), lambda b, m, c: (b, m, 0, 0)),
        ),
        compiler_params=pltpu.CompilerParams(
            dimension_semantics=("parallel", "parallel"),
        ),
    )(coef, x3, n3, bias, w1, w2, b2)

    return jnp.sum(partials) * (1.0 / float(B * N * C))


# ---------------------------------------------------------------------------
# Pure-JAX reference (same synthetic bf16-MXU denoiser, same randoms)
# ---------------------------------------------------------------------------
def diffusion_loss_reference(x, noise, t, buffers, params):
    B, N, C = x.shape
    H = params["w1"].shape[1]
    a = buffers["sqrt_alphas_cumprod"][t][:, None, None]
    s = buffers["sqrt_one_minus_alphas_cumprod"][t][:, None, None]
    perturbed = a * x + s * noise
    h = jnp.dot(perturbed.reshape(B * N, C).astype(jnp.bfloat16),
                params["w1"].astype(jnp.bfloat16),
                preferred_element_type=jnp.float32).reshape(B, N, H)
    h = h + params["b1"] + params["temb"][t][:, None, :]
    h = h * (1.0 / (1.0 + jnp.exp(-h)))
    est = jnp.dot(h.reshape(B * N, H).astype(jnp.bfloat16),
                  params["w2"].astype(jnp.bfloat16),
                  preferred_element_type=jnp.float32).reshape(B, N, C)
    est = est + params["b2"]
    return jnp.mean((est - noise) ** 2)


# ---------------------------------------------------------------------------
# Parameter / buffer construction (deterministic, in-script)
# ---------------------------------------------------------------------------
def make_buffers(num_timesteps):
    betas = np.linspace(1e-4, 0.02, num_timesteps, dtype=np.float64)
    alphas = 1.0 - betas
    alphas_cumprod = np.cumprod(alphas)
    return {
        "betas": jnp.asarray(betas, jnp.float32),
        "alphas": jnp.asarray(alphas, jnp.float32),
        "alphas_cumprod": jnp.asarray(alphas_cumprod, jnp.float32),
        "sqrt_alphas_cumprod": jnp.asarray(np.sqrt(alphas_cumprod), jnp.float32),
        "sqrt_one_minus_alphas_cumprod": jnp.asarray(np.sqrt(1 - alphas_cumprod), jnp.float32),
        "reciprocal_sqrt_alphas": jnp.asarray(np.sqrt(1 / alphas), jnp.float32),
        "remove_noise_coeff": jnp.asarray(betas / np.sqrt(1 - alphas_cumprod), jnp.float32),
        "sigma": jnp.asarray(np.sqrt(betas), jnp.float32),
    }


def make_model_params(key, num_timesteps, C, H):
    k1, k2, k3 = jax.random.split(key, 3)
    return {
        "w1": jax.random.normal(k1, (C, H), jnp.float32) * (1.0 / np.sqrt(C)),
        "b1": jnp.zeros((1, H), jnp.float32),
        "w2": jax.random.normal(k2, (H, C), jnp.float32) * (1.0 / np.sqrt(H)),
        "b2": jnp.zeros((1, C), jnp.float32),
        "temb": jax.random.normal(k3, (num_timesteps, H), jnp.float32) * 0.02,
    }


if __name__ == "__main__":
    # Small shapes consistent with forward(): x is [B, N, C]
    B, N, C, H = 2, 10, 32, 64
    NUM_TIMESTEPS = 100

    key = jax.random.PRNGKey(0)
    kx, kn, kt, kp = jax.random.split(key, 4)

    x = jax.random.normal(kx, (B, N, C), jnp.float32)
    noise = jax.random.normal(kn, (B, N, C), jnp.float32)           # randn_like(x)
    t = jax.random.randint(kt, (B,), 0, NUM_TIMESTEPS, jnp.int32)   # randint(0, T, (B,))

    buffers = make_buffers(NUM_TIMESTEPS)
    params = make_model_params(kp, NUM_TIMESTEPS, C, H)

    ref = jax.block_until_ready(diffusion_loss_reference(x, noise, t, buffers, params))

    # Default path: one 16-row tile per batch (N=10 padded to 16, masked in-kernel).
    loss = jax.block_until_ready(diffusion_loss_pallas(x, noise, t, buffers, params))
    # Tolerance covers bf16 MXU rounding + approx EUP reciprocal in the SiLU.
    assert np.allclose(np.asarray(loss), np.asarray(ref), rtol=2e-3, atol=1e-4), (loss, ref)

    # Multi-tile path (grid = (B, 2), exercises padded-row masking and both
    # "parallel" grid axes).
    loss_mb = jax.block_until_ready(
        diffusion_loss_pallas(x, noise, t, buffers, params, block_rows=8))
    assert np.allclose(np.asarray(loss_mb), np.asarray(ref), rtol=2e-3, atol=1e-4), (loss_mb, ref)

    print("KERNEL_OK")
</pallas_src>

<mosaic_0001>
module attributes {stable_mosaic.version = 11 : i64} {
  func.func @_diffusion_loss_kernel(%arg0: i32, %arg1: i32, %arg2: memref<2x2xf32, #tpu.memory_space<smem>>, %arg3: memref<1x16x32xf32, #tpu.memory_space<vmem>>, %arg4: memref<1x16x32xf32, #tpu.memory_space<vmem>>, %arg5: memref<1x1x64xf32, #tpu.memory_space<vmem>>, %arg6: memref<32x64xbf16, #tpu.memory_space<vmem>>, %arg7: memref<64x32xbf16, #tpu.memory_space<vmem>>, %arg8: memref<1x32xf32, #tpu.memory_space<vmem>>, %arg9: memref<1x1x8x32xf32, #tpu.memory_space<vmem>>) attributes {dimension_semantics = [#tpu.dimension_semantics<parallel>, #tpu.dimension_semantics<parallel>], iteration_bounds = array<i64: 2, 1>, scalar_prefetch = 1 : i64, scratch_operands = 0 : i64, tpu.core_type = #tpu.core_type<tc>, window_params = [{transform_indices = @transform_0, window_bounds = array<i64: 1, 16, 32>}, {transform_indices = @transform_1, window_bounds = array<i64: 1, 16, 32>}, {transform_indices = @transform_2, window_bounds = array<i64: 1, 1, 64>}, {pipeline_mode = #tpu.pipeline_mode<synchronous>, transform_indices = @transform_3, window_bounds = array<i64: 32, 64>}, {pipeline_mode = #tpu.pipeline_mode<synchronous>, transform_indices = @transform_4, window_bounds = array<i64: 64, 32>}, {pipeline_mode = #tpu.pipeline_mode<synchronous>, transform_indices = @transform_5, window_bounds = array<i64: 1, 32>}, {transform_indices = @transform_6, window_bounds = array<i64: 1, 1, 8, 32>}]} {
    %c0 = arith.constant 0 : index
    %c0_0 = arith.constant 0 : index
    %c0_1 = arith.constant 0 : index
    %0 = vector.load %arg3[%c0, %c0_0, %c0_1] : memref<1x16x32xf32, #tpu.memory_space<vmem>>, vector<1x16x32xf32>
    %1 = vector.shape_cast %0 : vector<1x16x32xf32> to vector<16x32xf32>
    %c0_2 = arith.constant 0 : index
    %c0_3 = arith.constant 0 : index
    %c0_4 = arith.constant 0 : index
    %2 = vector.load %arg4[%c0_2, %c0_3, %c0_4] : memref<1x16x32xf32, #tpu.memory_space<vmem>>, vector<1x16x32xf32>
    %3 = vector.shape_cast %2 : vector<1x16x32xf32> to vector<16x32xf32>
    %c0_5 = arith.constant 0 : index
    %4 = arith.index_cast %arg0 : i32 to index
    %5 = memref.load %arg2[%c0_5, %4] : memref<2x2xf32, #tpu.memory_space<smem>>
    %c1 = arith.constant 1 : index
    %6 = arith.index_cast %arg0 : i32 to index
    %7 = memref.load %arg2[%c1, %6] : memref<2x2xf32, #tpu.memory_space<smem>>
    %8 = vector.broadcast %5 : f32 to vector<16x32xf32>
    %9 = arith.mulf %8, %1 : vector<16x32xf32>
    %10 = vector.broadcast %7 : f32 to vector<16x32xf32>
    %11 = arith.mulf %10, %3 : vector<16x32xf32>
    %12 = arith.addf %9, %11 : vector<16x32xf32>
    %13 = arith.truncf %12 : vector<16x32xf32> to vector<16x32xbf16>
    %c0_6 = arith.constant 0 : index
    %c0_7 = arith.constant 0 : index
    %14 = vector.load %arg6[%c0_6, %c0_7] : memref<32x64xbf16, #tpu.memory_space<vmem>>, vector<32x64xbf16>
    %cst = arith.constant dense<0.000000e+00> : vector<16x64xf32>
    %15 = tpu.matmul %13, %14, %cst {dimension_numbers = #tpu.dot_dimension_numbers<[1], [0], [0], [1], [0, 0, 1, 1], [], []>} : vector<16x32xbf16>, vector<32x64xbf16>, vector<16x64xf32> -> vector<16x64xf32>
    %c0_8 = arith.constant 0 : index
    %c0_9 = arith.constant 0 : index
    %c0_10 = arith.constant 0 : index
    %16 = vector.load %arg5[%c0_8, %c0_9, %c0_10] : memref<1x1x64xf32, #tpu.memory_space<vmem>>, vector<1x1x64xf32>
    %17 = vector.shape_cast %16 : vector<1x1x64xf32> to vector<1x64xf32>
    %18 = vector.broadcast %17 : vector<1x64xf32> to vector<16x64xf32>
    %19 = arith.addf %15, %18 : vector<16x64xf32>
    %cst_11 = arith.constant 0.000000e+00 : f32
    %20 = vector.broadcast %cst_11 : f32 to vector<16x64xf32>
    %21 = arith.subf %20, %19 : vector<16x64xf32>
    %22 = math.exp %21 : vector<16x64xf32>
    %cst_12 = arith.constant 1.000000e+00 : f32
    %23 = vector.broadcast %cst_12 : f32 to vector<16x64xf32>
    %24 = arith.addf %23, %22 : vector<16x64xf32>
    %25 = tpu.reciprocal %24 {approx = true} : vector<16x64xf32> -> vector<16x64xf32>
    %26 = arith.mulf %19, %25 : vector<16x64xf32>
    %27 = arith.truncf %26 : vector<16x64xf32> to vector<16x64xbf16>
    %c0_13 = arith.constant 0 : index
    %c0_14 = arith.constant 0 : index
    %28 = vector.load %arg7[%c0_13, %c0_14] : memref<64x32xbf16, #tpu.memory_space<vmem>>, vector<64x32xbf16>
    %cst_15 = arith.constant dense<0.000000e+00> : vector<16x32xf32>
    %29 = tpu.matmul %27, %28, %cst_15 {dimension_numbers = #tpu.dot_dimension_numbers<[1], [0], [0], [1], [0, 0, 1, 1], [], []>} : vector<16x64xbf16>, vector<64x32xbf16>, vector<16x32xf32> -> vector<16x32xf32>
    %c0_16 = arith.constant 0 : index
    %c0_17 = arith.constant 0 : index
    %30 = vector.load %arg8[%c0_16, %c0_17] : memref<1x32xf32, #tpu.memory_space<vmem>>, vector<1x32xf32>
    %31 = vector.broadcast %30 : vector<1x32xf32> to vector<16x32xf32>
    %32 = arith.addf %29, %31 : vector<16x32xf32>
    %33 = arith.subf %32, %3 : vector<16x32xf32>
    %c16_i32 = arith.constant 16 : i32
    %34 = arith.muli %arg1, %c16_i32 : i32
    %35 = tpu.iota {dimensions = array<i32: 0>} : vector<16x32xi32>
    %36 = vector.broadcast %34 : i32 to vector<16x32xi32>
    %37 = arith.addi %36, %35 : vector<16x32xi32>
    %c10_i32 = arith.constant 10 : i32
    %38 = vector.broadcast %c10_i32 : i32 to vector<16x32xi32>
    %39 = arith.cmpi slt, %37, %38 : vector<16x32xi32>
    %cst_18 = arith.constant 0.000000e+00 : f32
    %40 = vector.broadcast %cst_18 : f32 to vector<16x32xf32>
    %41 = arith.select %39, %33, %40 : vector<16x32xi1>, vector<16x32xf32>
    %42 = arith.mulf %41, %41 : vector<16x32xf32>
    %43 = vector.extract_strided_slice %42 {offsets = [0, 0], sizes = [8, 32], strides = [1, 1]} : vector<16x32xf32> to vector<8x32xf32>
    %44 = vector.extract_strided_slice %42 {offsets = [8, 0], sizes = [8, 32], strides = [1, 1]} : vector<16x32xf32> to vector<8x32xf32>
    %45 = arith.addf %43, %44 : vector<8x32xf32>
    %c0_19 = arith.constant 0 : index
    %c0_20 = arith.constant 0 : index
    %c0_21 = arith.constant 0 : index
    %c0_22 = arith.constant 0 : index
    %46 = vector.load %arg9[%c0_19, %c0_20, %c0_21, %c0_22] : memref<1x1x8x32xf32, #tpu.memory_space<vmem>>, vector<1x1x8x32xf32>
    %47 = vector.shape_cast %46 : vector<1x1x8x32xf32> to vector<8x32xf32>
    %48 = vector.shape_cast %45 : vector<8x32xf32> to vector<1x1x8x32xf32>
    tpu.vector_store %arg9[%c0_19, %c0_20, %c0_21, %c0_22], %48 {strides = array<i32>} : memref<1x1x8x32xf32, #tpu.memory_space<vmem>>, vector<1x1x8x32xf32>,
    return
  }
  func.func @transform_0(%arg0: i32, %arg1: i32, %arg2: memref<2x2xf32, #tpu.memory_space<smem>>) -> (i32, i32, i32) {
    %c0_i32 = arith.constant 0 : i32
    %c0_i32_0 = arith.constant 0 : i32
    return %arg0, %arg1, %c0_i32 : i32, i32, i32
  }
  func.func @transform_1(%arg0: i32, %arg1: i32, %arg2: memref<2x2xf32, #tpu.memory_space<smem>>) -> (i32, i32, i32) {
    %c0_i32 = arith.constant 0 : i32
    %c0_i32_0 = arith.constant 0 : i32
    return %arg0, %arg1, %c0_i32 : i32, i32, i32
  }
  func.func @transform_2(%arg0: i32, %arg1: i32, %arg2: memref<2x2xf32, #tpu.memory_space<smem>>) -> (i32, i32, i32) {
    %c0_i32 = arith.constant 0 : i32
    %c0_i32_0 = arith.constant 0 : i32
    %c0_i32_1 = arith.constant 0 : i32
    return %arg0, %c0_i32, %c0_i32_0 : i32, i32, i32
  }
  func.func @transform_3(%arg0: i32, %arg1: i32, %arg2: memref<2x2xf32, #tpu.memory_space<smem>>) -> (i32, i32) {
    %c0_i32 = arith.constant 0 : i32
    %c0_i32_0 = arith.constant 0 : i32
    %c0_i32_1 = arith.constant 0 : i32
    return %c0_i32, %c0_i32_0 : i32, i32
  }
  func.func @transform_4(%arg0: i32, %arg1: i32, %arg2: memref<2x2xf32, #tpu.memory_space<smem>>) -> (i32, i32) {
    %c0_i32 = arith.constant 0 : i32
    %c0_i32_0 = arith.constant 0 : i32
    %c0_i32_1 = arith.constant 0 : i32
    return %c0_i32, %c0_i32_0 : i32, i32
  }
  func.func @transform_5(%arg0: i32, %arg1: i32, %arg2: memref<2x2xf32, #tpu.memory_space<smem>>) -> (i32, i32) {
    %c0_i32 = arith.constant 0 : i32
    %c0_i32_0 = arith.constant 0 : i32
    %c0_i32_1 = arith.constant 0 : i32
    return %c0_i32, %c0_i32_0 : i32, i32
  }
  func.func @transform_6(%arg0: i32, %arg1: i32, %arg2: memref<2x2xf32, #tpu.memory_space<smem>>) -> (i32, i32, i32, i32) {
    %c0_i32 = arith.constant 0 : i32
    %c0_i32_0 = arith.constant 0 : i32
    %c0_i32_1 = arith.constant 0 : i32
    return %arg0, %arg1, %c0_i32, %c0_i32_0 : i32, i32, i32, i32
  }
}

</mosaic_0001>

<llo_original>
// kernel: tpu_custom_call.1
$region0: #{tpu_custom_call.1}
  #allocation0 [shape = 'u32[]', space=smem, size = 0x4, offset = 0x4, fixed_abs, tag = 'smem constant byte address 0x4 - core index']
  #allocation1 [shape = 'u32[144,128]{1,0:T(1,128)}', space=vmem, size = 0x12000, scoped, tag = 'internal scratch']
  #allocation2 [shape = 's32[1]{0}', space=sflag, size = 0x4, scoped, tag = 'scoped memory for tpu_custom_call.1']
  #allocation3 [shape = 'u8[1024]{0}', space=smem, size = 0x400, scoped, tag = 'prefetched SMEM operand 0']
  %s0 = inlined_call_operand.vmem [shape: f32[2,2], index: 0, kind: input, shape index: {}]
  %s1 = inlined_call_operand.vmem [shape: f32[2,16,32], index: 1, kind: input, shape index: {}]
  %s2 = inlined_call_operand.hbm [shape: f32[2,16,32], index: 2, kind: input, shape index: {}]
  %s3 = inlined_call_operand.hbm [shape: f32[2,1,64], index: 3, kind: input, shape index: {}]
  %s4 = inlined_call_operand.vmem [shape: bf16[32,64], index: 4, kind: input, shape index: {}]
  %s5 = inlined_call_operand.vmem [shape: bf16[64,32], index: 5, kind: input, shape index: {}]
  %s6 = inlined_call_operand.vmem [shape: f32[1,32], index: 6, kind: input, shape index: {}]
  %s7 = inlined_call_operand.hbm [shape: f32[2,1,8,32], index: 7, kind: output, shape index: {}]
  %s8 = sld [smem:[#allocation0]]
  $region65: #{tpu_custom_call.1} parent=0
    _
  %s10 = ssub.s32 1, %s8
  %s11 = scalar_select 0, %s10, %s8
  %s12 = sshll.u32 %s0, 4
  %s13 = int_to_ptr.vmem [resolvable:$true] %s12
  %15 = dma.vmem_to_smem %s13, 32, [#allocation3], [#allocation2]
  %16 = dma.done [#allocation2], 32
  %17 = sfence
  $region1: #{tpu_custom_call.1} parent=0
    #allocation4 [shape = 'u8[16384]{0}', space=vmem, size = 0x4000, scoped, tag = 'input window, operand 2']
    #allocation5 [shape = 's32[2]{0}', space=sflag, size = 0x8, scoped, tag = 'scoped memory for tpu_custom_call.1']
    #allocation6 [shape = 's32[2]{0}', space=sflag, size = 0x8, scoped, tag = 'scoped memory for tpu_custom_call.1']
    #allocation7 [shape = 'u8[1024]{0}', space=vmem, size = 0x400, scoped, tag = 'input window, operand 3']
    #allocation8 [shape = 's32[2]{0}', space=sflag, size = 0x8, scoped, tag = 'scoped memory for tpu_custom_call.1']
    #allocation9 [shape = 'u8[8192]{0}', space=vmem, size = 0x2000, scoped, tag = 'output window, operand 0']
    %18 = vsyncpa [#allocation5], 0
    %s19 = scalar_lea.sflag [#allocation5], 1
    %20 = vsyncpa %s19, 0
    %21 = vsyncpa [#allocation8], 0
    %s22 = scalar_lea.sflag [#allocation8], 1
    %23 = vsyncpa %s22, 0
    %24 = vsyncpa [#allocation6], 0
    %s25 = scalar_lea.sflag [#allocation6], 1
    %26 = vsyncpa %s25, 0
    loop: start=0, step=1, limit=4
    $region2: #{tpu_custom_call.1} parent=1 // loop_pre_header
      _
    $region3: #{tpu_custom_call.1} parent=1 // loop_header
      %s28 = sphi 0, %s32
      %p29 = scmp.ge.s32.totalorder %s28, 4
      %s35 = sphi 0, %s47
      %s36 = sphi 0, %s43
      %s37 = sphi 0, %s35
      %s38 = sphi 0, %s36
      %s39 = sphi 0, %s37
      %s40 = sphi 0, %s38
      %s52 = sphi 0, %s54
      %s55 = sphi 0, %s52
      %s56 = sphi 0, %s55
      %s72 = sphi 0, %s56
      %s80 = sphi 0, %s82
      %s83 = sphi 0, %s80
      %s84 = sphi 0, %s83
      %s100 = sphi 0, %s84
      %s106 = sphi 0, %s108
      %s109 = sphi 0, %s106
      %s110 = sphi 0, %s109
      %s126 = sphi 0, %s110
      %s130 = sphi 0, %s130
      %s132 = sphi 0, %s130
      %s133 = sphi 0, %s132
      %s147 = sphi 0, %s133
      %s151 = sphi 0, %s151
      %s153 = sphi 0, %s151
      %s154 = sphi 0, %s153
      %s168 = sphi 0, %s154
      %s172 = sphi 0, %s172
      %s174 = sphi 0, %s172
      %s175 = sphi 0, %s174
      %s189 = sphi 0, %s175
      %s197 = sphi 0, %s199
      %s200 = sphi 0, %s197
      %s201 = sphi 0, %s200
      %s217 = sphi 0, %s201
    $region4: #{tpu_custom_call.1} parent=1 // loop_header_branch
      %31 = sbr.rel (%p29) target = $region8
    $region5: #{tpu_custom_call.1} parent=1 // loop_body
      %s33 = ssub.s32 %s28, 1
      %s34 = ssub.s32 %s28, 2
      %s41 = sadd.s32 1, %s36
      %p42 = scmp.ge.s32.totalorder %s41, 1
      %s43 = scalar_select %p42, 0, %s41
      %s44 = sadd.s32 1, %s35
      %s45 = scalar_select %p42, %s44, %s35
      %p46 = scmp.ge.s32.totalorder %s45, 2
      %s47 = scalar_select %p46, 0, %s45
      %s48 = ssub.s32 %s35, %s47
      %s49 = ssub.s32 %s36, %s43
      %s50 = sor.u32 %s48, %s49
      %p51 = scmp.eq.s32.totalorder %s50, 0
      %s53 = sadd.s32 %s52, 1
      %s54 = scalar_select %p51, %s52, %s53
      %p57 = pneg %p51
      %p58 = scmp.eq.s32.totalorder %s28, 1
      %p59 = por %p57, %p58
      %p60 = scmp.ne.s32.totalorder %s52, %s55
      %p61 = scmp.eq.s32.totalorder %s28, 0
      %p62 = por %p60, %p61
      %p63 = scmp.ne.s32.totalorder %s52, %s55
      %p64 = scmp.eq.s32.totalorder %s33, 1
      %p65 = por %p63, %p64
      %p66 = scmp.ne.s32.totalorder %s55, %s56
      %p67 = scmp.eq.s32.totalorder %s33, 0
      %p68 = por %p66, %p67
      %p69 = scmp.ne.s32.totalorder %s55, %s56
      %p70 = scmp.eq.s32.totalorder %s34, 1
      %p71 = por %p69, %p70
      %p73 = scmp.ne.s32.totalorder %s56, %s72
      %p74 = scmp.eq.s32.totalorder %s34, 0
      %p75 = por %p73, %p74
      %s76 = ssub.s32 %s35, %s47
      %s77 = ssub.s32 %s36, %s43
      %s78 = sor.u32 %s76, %s77
      %p79 = scmp.eq.s32.totalorder %s78, 0
      %s81 = sadd.s32 %s80, 1
      %s82 = scalar_select %p79, %s80, %s81
      %p85 = pneg %p79
      %p86 = scmp.eq.s32.totalorder %s28, 1
      %p87 = por %p85, %p86
      %p88 = scmp.ne.s32.totalorder %s80, %s83
      %p89 = scmp.eq.s32.totalorder %s28, 0
      %p90 = por %p88, %p89
      %p91 = scmp.ne.s32.totalorder %s80, %s83
      %p92 = scmp.eq.s32.totalorder %s33, 1
      %p93 = por %p91, %p92
      %p94 = scmp.ne.s32.totalorder %s83, %s84
      %p95 = scmp.eq.s32.totalorder %s33, 0
      %p96 = por %p94, %p95
      %p97 = scmp.ne.s32.totalorder %s83, %s84
      %p98 = scmp.eq.s32.totalorder %s34, 1
      %p99 = por %p97, %p98
      %p101 = scmp.ne.s32.totalorder %s84, %s100
      %p102 = scmp.eq.s32.totalorder %s34, 0
      %p103 = por %p101, %p102
      %s104 = ssub.s32 %s35, %s47
      %p105 = scmp.eq.s32.totalorder %s104, 0
      %s107 = sadd.s32 %s106, 1
      %s108 = scalar_select %p105, %s106, %s107
      %p111 = pneg %p105
      %p112 = scmp.eq.s32.totalorder %s28, 1
      %p113 = por %p111, %p112
      %p114 = scmp.ne.s32.totalorder %s106, %s109
      %p115 = scmp.eq.s32.totalorder %s28, 0
      %p116 = por %p114, %p115
      %p117 = scmp.ne.s32.totalorder %s106, %s109
      %p118 = scmp.eq.s32.totalorder %s33, 1
      %p119 = por %p117, %p118
      %p120 = scmp.ne.s32.totalorder %s109, %s110
      %p121 = scmp.eq.s32.totalorder %s33, 0
      %p122 = por %p120, %p121
      %p123 = scmp.ne.s32.totalorder %s109, %s110
      %p124 = scmp.eq.s32.totalorder %s34, 1
      %p125 = por %p123, %p124
      %p127 = scmp.ne.s32.totalorder %s110, %s126
      %p128 = scmp.eq.s32.totalorder %s34, 0
      %p129 = por %p127, %p128
      %s131 = sadd.s32 %s130, 1
      %p134 = scmp.eq.s32.totalorder %s28, 1
      %p135 = scmp.ne.s32.totalorder %s130, %s132
      %p136 = scmp.eq.s32.totalorder %s28, 0
      %p137 = por %p135, %p136
      %p138 = scmp.ne.s32.totalorder %s130, %s132
      %p139 = scmp.eq.s32.totalorder %s33, 1
      %p140 = por %p138, %p139
      %p141 = scmp.ne.s32.totalorder %s132, %s133
      %p142 = scmp.eq.s32.totalorder %s33, 0
      %p143 = por %p141, %p142
      %p144 = scmp.ne.s32.totalorder %s132, %s133
      %p145 = scmp.eq.s32.totalorder %s34, 1
      %p146 = por %p144, %p145
      %p148 = scmp.ne.s32.totalorder %s133, %s147
      %p149 = scmp.eq.s32.totalorder %s34, 0
      %p150 = por %p148, %p149
      %s152 = sadd.s32 %s151, 1
      %p155 = scmp.eq.s32.totalorder %s28, 1
      %p156 = scmp.ne.s32.totalorder %s151, %s153
      %p157 = scmp.eq.s32.totalorder %s28, 0
      %p158 = por %p156, %p157
      %p159 = scmp.ne.s32.totalorder %s151, %s153
      %p160 = scmp.eq.s32.totalorder %s33, 1
      %p161 = por %p159, %p160
      %p162 = scmp.ne.s32.totalorder %s153, %s154
      %p163 = scmp.eq.s32.totalorder %s33, 0
      %p164 = por %p162, %p163
      %p165 = scmp.ne.s32.totalorder %s153, %s154
      %p166 = scmp.eq.s32.totalorder %s34, 1
      %p167 = por %p165, %p166
      %p169 = scmp.ne.s32.totalorder %s154, %s168
      %p170 = scmp.eq.s32.totalorder %s34, 0
      %p171 = por %p169, %p170
      %s173 = sadd.s32 %s172, 1
      %p176 = scmp.eq.s32.totalorder %s28, 1
      %p177 = scmp.ne.s32.totalorder %s172, %s174
      %p178 = scmp.eq.s32.totalorder %s28, 0
      %p179 = por %p177, %p178
      %p180 = scmp.ne.s32.totalorder %s172, %s174
      %p181 = scmp.eq.s32.totalorder %s33, 1
      %p182 = por %p180, %p181
      %p183 = scmp.ne.s32.totalorder %s174, %s175
      %p184 = scmp.eq.s32.totalorder %s33, 0
      %p185 = por %p183, %p184
      %p186 = scmp.ne.s32.totalorder %s174, %s175
      %p187 = scmp.eq.s32.totalorder %s34, 1
      %p188 = por %p186, %p187
      %p190 = scmp.ne.s32.totalorder %s175, %s189
      %p191 = scmp.eq.s32.totalorder %s34, 0
      %p192 = por %p190, %p191
      %s193 = ssub.s32 %s35, %s47
      %s194 = ssub.s32 %s36, %s43
      %s195 = sor.u32 %s193, %s194
      %p196 = scmp.eq.s32.totalorder %s195, 0
      %s198 = sadd.s32 %s197, 1
      %s199 = scalar_select %p196, %s197, %s198
      %p202 = pneg %p196
      %p203 = scmp.eq.s32.totalorder %s28, 1
      %p204 = por %p202, %p203
      %p205 = scmp.ne.s32.totalorder %s197, %s200
      %p206 = scmp.eq.s32.totalorder %s28, 0
      %p207 = por %p205, %p206
      %p208 = scmp.ne.s32.totalorder %s197, %s200
      %p209 = scmp.eq.s32.totalorder %s33, 1
      %p210 = por %p208, %p209
      %p211 = scmp.ne.s32.totalorder %s200, %s201
      %p212 = scmp.eq.s32.totalorder %s33, 0
      %p213 = por %p211, %p212
      %p214 = scmp.ne.s32.totalorder %s200, %s201
      %p215 = scmp.eq.s32.totalorder %s34, 1
      %p216 = por %p214, %p215
      %p218 = scmp.ne.s32.totalorder %s201, %s217
      %p219 = scmp.eq.s32.totalorder %s34, 0
      %p220 = por %p218, %p219
      %p221 = scmp.le.s32.totalorder 1, %s28
      %p222 = scmp.lt.s32.totalorder %s28, 3
      %p223 = pnand %p221, %p222
      %p224 = pneg %p223
      // Predicated region
      $region9: #{tpu_custom_call.1} parent=5 // pred_check
        _
      $region10: #{tpu_custom_call.1} parent=5 // pred_check_branch
        %226 = sbr.rel (%p223) target = $region12
      $region11: #{tpu_custom_call.1} parent=5 // pred_region
        %s227 = ssub.s32 %s28, 1
        // Predicated region
        $region13: #{tpu_custom_call.1} parent=11 // pred_check
          %p228 = pneg %p143
        $region14: #{tpu_custom_call.1} parent=11 // pred_check_branch
          %230 = sbr.rel (%p228) target = $region16
        $region15: #{tpu_custom_call.1} parent=11 // pred_region
          _
        $region16: #{tpu_custom_call.1} parent=11 // pred_fallthru
          _
        // Predicated region
        $region17: #{tpu_custom_call.1} parent=11 // pred_check
          %p231 = pneg %p164
        $region18: #{tpu_custom_call.1} parent=11 // pred_check_branch
          %233 = sbr.rel (%p231) target = $region20
        $region19: #{tpu_custom_call.1} parent=11 // pred_region
          _
        $region20: #{tpu_custom_call.1} parent=11 // pred_fallthru
          _
        // Predicated region
        $region21: #{tpu_custom_call.1} parent=11 // pred_check
          %p234 = pneg %p185
        $region22: #{tpu_custom_call.1} parent=11 // pred_check_branch
          %236 = sbr.rel (%p234) target = $region24
        $region23: #{tpu_custom_call.1} parent=11 // pred_region
          _
        $region24: #{tpu_custom_call.1} parent=11 // pred_fallthru
          _
      $region12: #{tpu_custom_call.1} parent=5 // pred_fallthru
        _
      %p237 = scmp.lt.s32.totalorder %s28, 2
      // Predicated region
      $region25: #{tpu_custom_call.1} parent=5 // pred_check
        %p238 = pneg %p237
      $region26: #{tpu_custom_call.1} parent=5 // pred_check_branch
        %240 = sbr.rel (%p238) target = $region28
      $region27: #{tpu_custom_call.1} parent=5 // pred_region
        // Predicated region
        $region29: #{tpu_custom_call.1} parent=27 // pred_check
          %p241 = pneg %p62
        $region30: #{tpu_custom_call.1} parent=27 // pred_check_branch
          %243 = sbr.rel (%p241) target = $region32
        $region31: #{tpu_custom_call.1} parent=27 // pred_region
          %s244 = smul.u32 2, %s36
          %p245 = scmp.lt.s32.totalorder %s35, 1
          %s246 = scalar_select %p245, %s35, 1
          %p247 = scmp.lt.s32.totalorder %s244, 1
          %s248 = scalar_select %p247, %s244, 1
          %s249 = smul.addr %s246, 2
          %s250 = sadd.s32 %s248, %s249
          %s251 = smul.addr %s250, 8
          %s252 = scalar_lea.vmem %s1, %s251
          %s253 = smul.u32 2, %s36
        $region32: #{tpu_custom_call.1} parent=27 // pred_fallthru
          _
        // Predicated region
        $region33: #{tpu_custom_call.1} parent=27 // pred_check
          %p254 = pneg %p90
        $region34: #{tpu_custom_call.1} parent=27 // pred_check_branch
          %256 = sbr.rel (%p254) target = $region36
        $region35: #{tpu_custom_call.1} parent=27 // pred_region
          %s257 = sand.u32 %s80, 1
          %s258 = scalar_lea.sflag [#allocation5], %s257
          %s259 = sand.u32 %s80, 1
          %s260 = smul.addr %s259, 16
          %s261 = scalar_lea.vmem [#allocation4], %s260
          %s262 = smul.u32 2, %s36
          %s264 = ssub.s32 256, 256
          %265 = vsyncadd %s258, %s264
          %s266 = smul.addr %s35, 2
          %s267 = sadd.s32 %s262, %s266
          %s268 = smul.addr %s267, 128
          %s269 = scalar_lea.hbm %s2, %s268
          %s270 = sshll.u32 %s261, 4
          %s271 = int_to_ptr.vmem [resolvable:$true] %s270
          %276 = dma.hbm_to_vmem [thread:$0]  %s269, 256, %s271, %s258, 128, 128, 8
        $region36: #{tpu_custom_call.1} parent=27 // pred_fallthru
          _
        // Predicated region
        $region37: #{tpu_custom_call.1} parent=27 // pred_check
          %p277 = pneg %p116
        $region38: #{tpu_custom_call.1} parent=27 // pred_check_branch
          %279 = sbr.rel (%p277) target = $region40
        $region39: #{tpu_custom_call.1} parent=27 // pred_region
          %s280 = sand.u32 %s106, 1
          %s281 = scalar_lea.sflag [#allocation8], %s280
          %s282 = sand.u32 %s106, 1
          %s283 = scalar_lea.vmem [#allocation7], %s282
          %s285 = ssub.s32 16, 16
          %286 = vsyncadd %s281, %s285
          %s287 = smul.addr %s35, 16
          %s288 = scalar_lea.hbm %s3, %s287
          %s290 = sshll.u32 %s283, 4
          %s291 = int_to_ptr.vmem [resolvable:$true] %s290
          %293 = dma.hbm_to_vmem [thread:$0]  %s288, 16, %s291, %s281
        $region40: #{tpu_custom_call.1} parent=27 // pred_fallthru
          _
      $region28: #{tpu_custom_call.1} parent=5 // pred_fallthru
        _
      %p294 = scmp.le.s32.totalorder 1, %s28
      %p295 = scmp.lt.s32.totalorder %s28, 3
      %p296 = pnand %p294, %p295
      %p297 = pneg %p296
      // Predicated region
      $region41: #{tpu_custom_call.1} parent=5 // pred_check
        _
      $region42: #{tpu_custom_call.1} parent=5 // pred_check_branch
        %299 = sbr.rel (%p296) target = $region44
      $region43: #{tpu_custom_call.1} parent=5 // pred_region
        %s300 = ssub.s32 %s28, 1
        %s301 = sand.u32 %s83, 1
        %s302 = scalar_lea.sflag [#allocation5], %s301
        %s303 = sand.u32 %s83, 1
        %s304 = smul.addr %s303, 16
        %s305 = scalar_lea.vmem [#allocation4], %s304
        // Predicated region
        $region45: #{tpu_custom_call.1} parent=43 // pred_check
          %p306 = pneg %p96
        $region46: #{tpu_custom_call.1} parent=43 // pred_check_branch
          %308 = sbr.rel (%p306) target = $region48
        $region47: #{tpu_custom_call.1} parent=43 // pred_region
          %309 = dma.done %s302, 256
        $region48: #{tpu_custom_call.1} parent=43 // pred_fallthru
          _
        %s310 = sand.u32 %s109, 1
        %s311 = scalar_lea.sflag [#allocation8], %s310
        %s312 = sand.u32 %s109, 1
        %s313 = scalar_lea.vmem [#allocation7], %s312
        // Predicated region
        $region49: #{tpu_custom_call.1} parent=43 // pred_check
          %p314 = pneg %p122
        $region50: #{tpu_custom_call.1} parent=43 // pred_check_branch
          %316 = sbr.rel (%p314) target = $region52
        $region51: #{tpu_custom_call.1} parent=43 // pred_region
          %317 = dma.done %s311, 16
        $region52: #{tpu_custom_call.1} parent=43 // pred_fallthru
          _
        %s318 = smul.u32 2, %s38
        %p319 = scmp.lt.s32.totalorder %s37, 1
        %s320 = scalar_select %p319, %s37, 1
        %p321 = scmp.lt.s32.totalorder %s318, 1
        %s322 = scalar_select %p321, %s318, 1
        %s323 = smul.addr %s320, 2
        %s324 = sadd.s32 %s322, %s323
        %s325 = smul.addr %s324, 8
        %s326 = scalar_lea.vmem %s1, %s325
        %p327 = pneg %p68
        %p328 = pneg %p65
        %s329 = sand.u32 %s83, 1
        %s330 = scalar_lea.sflag [#allocation5], %s329
        %s331 = sand.u32 %s83, 1
        %s332 = smul.addr %s331, 16
        %s333 = scalar_lea.vmem [#allocation4], %s332
        %p334 = pneg %p96
        %p335 = pneg %p93
        %s336 = sand.u32 %s109, 1
        %s337 = scalar_lea.sflag [#allocation8], %s336
        %s338 = sand.u32 %s109, 1
        %s339 = scalar_lea.vmem [#allocation7], %s338
        %p340 = pneg %p122
        %p341 = pneg %p119
        %p342 = pneg %p143
        %p343 = pneg %p140
        %p344 = pneg %p164
        %p345 = pneg %p161
        %p346 = pneg %p185
        %p347 = pneg %p182
        %p348 = pneg %p213
        %p349 = pneg %p210
        %s350 = sand.u32 %s200, 1
        %s351 = scalar_lea.sflag [#allocation6], %s350
        %s352 = sand.u32 %s200, 1
        %s353 = smul.addr %s352, 8
        %s354 = scalar_lea.vmem [#allocation9], %s353
        %s355 = smul.u32 2, %s38
        %p356 = scmp.lt.s32.totalorder %s37, 1
        %s357 = scalar_select %p356, %s37, 1
        %p358 = scmp.lt.s32.totalorder %s355, 1
        %s359 = scalar_select %p358, %s355, 1
        %s360 = smul.addr %s357, 2
        %s361 = sadd.s32 %s359, %s360
        %s362 = smul.addr %s361, 8
        %s363 = scalar_lea.vmem %s1, %s362
        %s364 = smul.u32 2, %s38
        %s365 = smul.u32 2, %s38
        %v367 = vld [vmem:[%s363] sm:$0xff]
        %v368 = vld [vmem:[%s363 + $0x8] sm:$0xff]
        %v369 = vld [vmem:[%s305] sm:$0xff]
        %v370 = vld [vmem:[%s305 + $0x8] sm:$0xff]
        %s371 = sld [smem:[#allocation3 + %s37]]
        %s372 = sshra.s32 %s37, 7
        %s373 = sand.u32 %s37, 127
        %s374 = sadd.s32 %s372, 1
        %s375 = smul.u32 %s374, 128
        %s376 = sshra.s32 %s37, 7
        %s377 = sand.u32 %s37, 127
        %s378 = sadd.s32 %s375, %s377
        %s379 = sld [smem:[#allocation3 + %s378]]
        %v380 = vstv %s371
        %v381 = vmul.f32 %v380, %v367
        %v382 = vmul.f32 %v380, %v368
        %v383 = vstv %s379
        %v384 = vmul.f32 %v383, %v369
        %v385 = vmul.f32 %v383, %v370
        %v386 = vadd.f32 %v381, %v384
        %v387 = vadd.f32 %v382, %v385
        %v388 = vpack.c.bf16 %v387, %v386
        %v389 = vld [vmem:[%s4] sm:$0xf]
        %v390 = vld [vmem:[%s4 + $0x4] sm:$0xf]
        %v391 = vld [vmem:[%s4 + $0x8] sm:$0xf]
        %v392 = vld [vmem:[%s4 + $0xc] sm:$0xf]
        %v393 = vld [vmem:[%s313] sm:$0x1]
        %v395 = vlaneseq
        %v396 = vshrl.u32 %v395, 7
        %v397 = vsub.s32 0, %v396
        %v398 = vrot.slane %v393, %v397
        %v404 = vunpack.c.l.b16 %v389
        %v405 = vunpack.c.l.b16 %v390
        %v406 = vunpack.c.l.b16 %v391
        %v407 = vunpack.c.l.b16 %v392
        %v408 = vpack.c.b16 %v405, %v404
        %v409 = vpack.c.b16 %v407, %v406
        %vm412 = vcmask 261120
        %v414 = vsel %vm412, %v388, 0
        %416 = vmatprep.subr.bf16.mxu0 0
        %417 = vmatpush1.bf16.msra.mxu0 %v408
        %418 = vmatprep.subr.bf16.mxu0 0
        %419 = vmatpush1.bf16.msra.mxu0 %v409
        %420 = vmatprep.subr.bf16.mxu0 0
        %421 = vmatpush1.bf16.msra.mxu0 0
        %422 = vmatprep.subr.bf16.mxu0 0
        %423 = vmatpush1.bf16.msra.mxu0 0
        %424 = vmatprep.subr.bf16.mxu0 0
        %425 = vmatpush1.bf16.msra.mxu0 0
        %426 = vmatprep.subr.bf16.mxu0 0
        %427 = vmatpush1.bf16.msra.mxu0 0
        %428 = vmatprep.subr.bf16.mxu0 0
        %429 = vmatpush1.bf16.msra.mxu0 0
        %430 = vmatprep.subr.bf16.mxu0 0
        %431 = vmatpush1.bf16.msra.mxu0 0
        %432 = vmatprep.subr.bf16.mxu0 0
        %433 = vmatpush1.bf16.msra.mxu0 0
        %434 = vmatprep.subr.bf16.mxu0 0
        %435 = vmatpush1.bf16.msra.mxu0 0
        %436 = vmatprep.subr.bf16.mxu0 0
        %437 = vmatpush1.bf16.msra.mxu0 0
        %438 = vmatprep.subr.bf16.mxu0 0
        %439 = vmatpush1.bf16.msra.mxu0 0
        %440 = vmatprep.subr.bf16.mxu0 0
        %441 = vmatpush1.bf16.msra.mxu0 0
        %442 = vmatprep.subr.bf16.mxu0 0
        %443 = vmatpush1.bf16.msra.mxu0 0
        %444 = vmatprep.subr.bf16.mxu0 0
        %445 = vmatpush1.bf16.msra.mxu0 0
        %446 = vmatprep.subr.bf16.mxu0 0
        %447 = vmatpush1.bf16.msra.mxu0 0
        %448 = vmatprep.mubr.bf16.mxu0 0
        %449 = vmatmul.mubr.bf16.gmra.mrb[0].mxu0 %v414
        %v450 = vpop.f32.mrb[0].mxu0
        %v451 = vadd.f32 %v398, %v450
        %v452 = vpop.f32.mrb[0].mxu0
        %v453 = vpop.f32.mrb[0].mxu0
        %v454 = vadd.f32 %v398, %v453
        %v455 = vpop.f32.mrb[0].mxu0
        %456 = vdwg.mxu0
        %v457 = vsub.f32 0.0, %v451
        %v458 = vsub.f32 0.0, %v454
        %v459 = vmul.f32 %v457, 1.442695
        %v460 = vpow.pop %v459
        %v461 = vmul.f32 %v458, 1.442695
        %v462 = vpow.pop %v461
        %v463 = vadd.f32 %v460, 1.0
        %v464 = vadd.f32 %v462, 1.0
        %v465 = vrcp.pop %v463
        %v466 = vrcp.pop %v464
        %v467 = vmul.f32 %v451, %v465
        %v468 = vmul.f32 %v454, %v466
        %v469 = vpack.c.bf16 %v468, %v467
        %v470 = vld [vmem:[%s5] sm:$0xf]
        %v471 = vld [vmem:[%s5 + $0x4] sm:$0xf]
        %v472 = vld [vmem:[%s5 + $0x8] sm:$0xf]
        %v473 = vld [vmem:[%s5 + $0xc] sm:$0xf]
        %v474 = vld [vmem:[%s5 + $0x10] sm:$0xf]
        %v475 = vld [vmem:[%s5 + $0x14] sm:$0xf]
        %v476 = vld [vmem:[%s5 + $0x18] sm:$0xf]
        %v477 = vld [vmem:[%s5 + $0x1c] sm:$0xf]
        %v478 = vld [vmem:[%s6] sm:$0x1]
        %v480 = vlaneseq
        %v481 = vshrl.u32 %v480, 7
        %v482 = vsub.s32 0, %v481
        %v483 = vrot.slane %v478, %v482
        %v493 = vunpack.c.l.b16 %v470
        %v494 = vunpack.c.l.b16 %v471
        %v495 = vunpack.c.l.b16 %v472
        %v496 = vunpack.c.l.b16 %v473
        %v497 = vunpack.c.l.b16 %v474
        %v498 = vunpack.c.l.b16 %v475
        %v499 = vunpack.c.l.b16 %v476
        %v500 = vunpack.c.l.b16 %v477
        %v501 = vpack.c.b16 %v494, %v493
        %v502 = vpack.c.b16 %v496, %v495
        %v503 = vpack.c.b16 %v498, %v497
        %v504 = vpack.c.b16 %v500, %v499
        %vm509 = vcmask 523264
        %v511 = vsel %vm509, %v469, 0
        %513 = vmatprep.subr.bf16.mxu0 0
        %514 = vmatpush1.bf16.msra.mxu0 %v501
        %515 = vmatprep.subr.bf16.mxu0 0
        %516 = vmatpush1.bf16.msra.mxu0 %v502
        %517 = vmatprep.subr.bf16.mxu0 0
        %518 = vmatpush1.bf16.msra.mxu0 %v503
        %519 = vmatprep.subr.bf16.mxu0 0
        %520 = vmatpush1.bf16.msra.mxu0 %v504
        %521 = vmatprep.subr.bf16.mxu0 0
        %522 = vmatpush1.bf16.msra.mxu0 0
        %523 = vmatprep.subr.bf16.mxu0 0
        %524 = vmatpush1.bf16.msra.mxu0 0
        %525 = vmatprep.subr.bf16.mxu0 0
        %526 = vmatpush1.bf16.msra.mxu0 0
        %527 = vmatprep.subr.bf16.mxu0 0
        %528 = vmatpush1.bf16.msra.mxu0 0
        %529 = vmatprep.subr.bf16.mxu0 0
        %530 = vmatpush1.bf16.msra.mxu0 0
        %531 = vmatprep.subr.bf16.mxu0 0
        %532 = vmatpush1.bf16.msra.mxu0 0
        %533 = vmatprep.subr.bf16.mxu0 0
        %534 = vmatpush1.bf16.msra.mxu0 0
        %535 = vmatprep.subr.bf16.mxu0 0
        %536 = vmatpush1.bf16.msra.mxu0 0
        %537 = vmatprep.subr.bf16.mxu0 0
        %538 = vmatpush1.bf16.msra.mxu0 0
        %539 = vmatprep.subr.bf16.mxu0 0
        %540 = vmatpush1.bf16.msra.mxu0 0
        %541 = vmatprep.subr.bf16.mxu0 0
        %542 = vmatpush1.bf16.msra.mxu0 0
        %543 = vmatprep.subr.bf16.mxu0 0
        %544 = vmatpush1.bf16.msra.mxu0 0
        %545 = vmatprep.mubr.bf16.mxu0 0
        %546 = vmatmul.mubr.bf16.gmra.mrb[0].mxu0 %v511
        %v547 = vpop.f32.mrb[0].mxu0
        %v548 = vadd.f32 %v483, %v547
        %v549 = vpop.f32.mrb[0].mxu0
        %v550 = vpop.f32.mrb[0].mxu0
        %v551 = vadd.f32 %v483, %v550
        %v552 = vpop.f32.mrb[0].mxu0
        %553 = vdwg.mxu0
        %v554 = vsub.f32 %v548, %v369
        %v555 = vsub.f32 %v551, %v370
        %s556 = smul.u32 %s38, 16
        %v557 = vlaneseq
        %v558 = vshrl.u32 %v557, 7
        %v559 = vadd.s32 %v558, 8
        %v560 = vstv %s556
        %v561 = vadd.s32 %v560, %v558
        %v562 = vadd.s32 %v560, %v559
        %vm563 = vcmp.lt.s32.totalorder %v561, 10
        %vm564 = vcmp.lt.s32.totalorder %v562, 10
        %v565 = vsel %vm563, %v554, 0.0
        %v566 = vsel %vm564, %v555, 0.0
        %v567 = vmul.f32 %v565, %v565
        %v568 = vmul.f32 %v566, %v566
        %v569 = vadd.f32 %v567, %v568
        %570 = vst.msk [vmem:[%s354] sm:$0xff] %vm412, %v569
        %s571 = sand.u32 %s200, 1
        %s572 = scalar_lea.sflag [#allocation6], %s571
        %s573 = sand.u32 %s200, 1
        %s574 = smul.addr %s573, 8
        %s575 = scalar_lea.vmem [#allocation9], %s574
        // Predicated region
        $region53: #{tpu_custom_call.1} parent=43 // pred_check
          %p576 = pneg %p210
        $region54: #{tpu_custom_call.1} parent=43 // pred_check_branch
          %578 = sbr.rel (%p576) target = $region56
        $region55: #{tpu_custom_call.1} parent=43 // pred_region
          %s580 = ssub.s32 128, 128
          %581 = vsyncadd %s572, %s580
          %s582 = sadd.s32 %s38, %s37
          %s583 = smul.addr %s582, 128
          %s584 = scalar_lea.hbm %s7, %s583
          %s586 = sshll.u32 %s575, 4
          %s587 = int_to_ptr.vmem [resolvable:$true] %s586
          %589 = dma.vmem_to_hbm [thread:$0]  %s587, 128, %s584, %s572
        $region56: #{tpu_custom_call.1} parent=43 // pred_fallthru
          _
      $region44: #{tpu_custom_call.1} parent=5 // pred_fallthru
        _
      %p590 = scmp.le.s32.totalorder 2, %s28
      // Predicated region
      $region57: #{tpu_custom_call.1} parent=5 // pred_check
        %p591 = pneg %p590
      $region58: #{tpu_custom_call.1} parent=5 // pred_check_branch
        %593 = sbr.rel (%p591) target = $region60
      $region59: #{tpu_custom_call.1} parent=5 // pred_region
        %s594 = ssub.s32 %s28, 2
        // Predicated region
        $region61: #{tpu_custom_call.1} parent=59 // pred_check
          %p595 = pneg %p216
        $region62: #{tpu_custom_call.1} parent=59 // pred_check_branch
          %597 = sbr.rel (%p595) target = $region64
        $region63: #{tpu_custom_call.1} parent=59 // pred_region
          %s598 = sand.u32 %s201, 1
          %s599 = scalar_lea.sflag [#allocation6], %s598
          %s600 = sand.u32 %s201, 1
          %s601 = smul.addr %s600, 8
          %s602 = scalar_lea.vmem [#allocation9], %s601
          %603 = dma.done %s599, 128
        $region64: #{tpu_custom_call.1} parent=59 // pred_fallthru
          _
      $region60: #{tpu_custom_call.1} parent=5 // pred_fallthru
        _
    $region6: #{tpu_custom_call.1} parent=1 // loop_footer
      %s32 = sadd.s32 1, %s28
    $region7: #{tpu_custom_call.1} parent=1 // loop_footer_branch
      %27 = sbr.rel target = $region3
    $region8: #{tpu_custom_call.1} parent=1 // loop_exit
      _
    %604 = vsyncpa [#allocation5], 1
    %s605 = scalar_lea.sflag [#allocation5], 1
    %606 = vsyncpa %s605, 1
    %607 = vsyncpa [#allocation8], 1
    %s608 = scalar_lea.sflag [#allocation8], 1
    %609 = vsyncpa %s608, 1
    %610 = vsyncpa [#allocation6], 1
    %s611 = scalar_lea.sflag [#allocation6], 1
    %612 = vsyncpa %s611, 1

</llo_original>
